<compile_context>
chip_gen: v5e
topology: v5e:2x2
jax: 0.10.0
libtpu: 0.0.40
codegen_flags: <defaults>
</compile_context>

<pallas_src>
import jax
import jax.numpy as jnp
from jax import lax
from jax.experimental import pallas as pl
from jax.experimental.pallas import tpu as pltpu


def _round_up(x, m):
    return (x + m - 1) // m * m


def fused_mlp_kernel(ids_ref, t1_ref, w_ref, b_ref, out_ref):
    tm = ids_ref.shape[0]
    V, H = t1_ref.shape
    cdt = w_ref.dtype  # bf16

    # Stage 1: embedding + fc1 + ReLU, pre-fused into T1 in the wrapper.
    # one_hot @ T1 is a row gather expressed as a small (K=V=32) MXU matmul.
    # TODO(synk): for large vocabularies switch to a scalar-prefetch row
    # gather / manual DMA gather instead of the one-hot matmul.
    ids = ids_ref[...]                                               # (tm, 1) int32
    one_hot = (ids == lax.broadcasted_iota(jnp.int32, (tm, V), 1)
               ).astype(jnp.float32)                                 # (tm, V) f32
    h = jnp.dot(one_hot, t1_ref[...],
                preferred_element_type=jnp.float32)                  # (tm, H) f32
    h = h.astype(cdt)          # only the bf16 copy stays live across the dot

    # Static, lane-aligned views into the concatenated weight / bias slabs.
    w2 = w_ref[:, :H]          # (H, H)      bf16
    w3 = w_ref[:, H:]          # (H, O_pad)  bf16
    b2 = b_ref[:, :H]          # (1, H)      f32
    b3 = b_ref[:, H:]          # (1, O_pad)  f32

    # fc2 + ReLU (bf16 x bf16 on the MXU, f32 accumulate, cast at the ReLU).
    h = jnp.maximum(
        jnp.dot(h, w2, preferred_element_type=jnp.float32) + b2, 0.0
    ).astype(cdt)

    # TODO(synk): nn.Dropout(p=0.5) is identity at inference; not applied here.

    # fc3 (columns lane-padded to 128 -> unmasked, lane-dense stores).
    out = jnp.dot(h, w3, preferred_element_type=jnp.float32) + b3
    out_ref[...] = out.astype(out_ref.dtype)


def custom_model_forward(ids, emb, w1, b1, w2, b2, w3, b3, *, tm=512):
    """ids: int (B, S). Weights are torch-layout (out, in); biases (out,)."""
    B, S = ids.shape
    N = B * S
    V, H = emb.shape
    O = w3.shape[0]

    f32 = jnp.float32
    cdt = jnp.bfloat16

    # --- Algebraic fusion: T1[v] = relu(emb[v] @ w1.T + b1), full f32. ------
    t1 = jnp.maximum(
        emb.astype(f32) @ w1.astype(f32).T + b1.astype(f32), 0.0)     # (V, H) f32

    # --- Concatenated bf16 weight slab and f32 bias slab for fc2 | fc3. -----
    O_pad = _round_up(O, 128)          # lane-dense output columns
    w3t_pad = jnp.zeros((H, O_pad), cdt).at[:, :O].set(w3.T.astype(cdt))
    w_slab = jnp.concatenate([w2.T.astype(cdt), w3t_pad], axis=1)     # (H, H+O_pad)
    b3_pad = jnp.zeros((1, O_pad), f32).at[:, :O].set(b3.astype(f32))
    b_slab = jnp.concatenate([b2.reshape(1, H).astype(f32), b3_pad],
                             axis=1)                                  # (1, H+O_pad)

    # --- Row tile / grid. ----------------------------------------------------
    n_rows = _round_up(N, 8)
    if n_rows <= tm:
        tm_eff = n_rows                          # single grid step for small N
    else:
        # MXU-native tiles; since n_rows > tm the grid has >= 2 steps, so the
        # "parallel" axis actually shards rows across both v7x TensorCores.
        tm_eff = _round_up(min(tm, n_rows), 256)
    N_pad = _round_up(N, tm_eff)

    ids_flat = jnp.pad(ids.reshape(N).astype(jnp.int32),
                       (0, N_pad - N)).reshape(N_pad, 1)

    grid = (N_pad // tm_eff,)
    resident = lambda shape: pl.BlockSpec(shape, lambda i: (0, 0))

    flops = 2 * N_pad * (V * H + H * H + H * O_pad)
    bytes_accessed = (ids_flat.size * 4 + t1.size * 4 + w_slab.size * 2
                      + b_slab.size * 4 + N_pad * O_pad * 2)

    out = pl.pallas_call(
        fused_mlp_kernel,
        out_shape=jax.ShapeDtypeStruct((N_pad, O_pad), cdt),
        grid_spec=pltpu.PrefetchScalarGridSpec(
            num_scalar_prefetch=0,
            grid=grid,
            in_specs=[
                pl.BlockSpec((tm_eff, 1), lambda i: (i, 0)),   # token id rows
                resident((V, H)),                              # fused emb+fc1 table (f32)
                resident((H, H + O_pad)),                      # fc2|fc3 weight slab (bf16)
                resident((1, H + O_pad)),                      # fc2|fc3 bias slab (f32)
            ],
            out_specs=pl.BlockSpec((tm_eff, O_pad), lambda i: (i, 0)),
        ),
        compiler_params=pltpu.CompilerParams(
            dimension_semantics=("parallel",)),
        cost_estimate=pl.CostEstimate(
            flops=flops, transcendentals=0, bytes_accessed=bytes_accessed),
    )(ids_flat, t1, w_slab, b_slab)

    # TODO(synk): for very large N the padded bf16 writeback can still dominate
    # HBM traffic; an unpadded (N_pad, O) output with masked stores may win.
    return out[:N, :O].astype(f32).reshape(B, S, O)


def reference_forward(ids, emb, w1, b1, w2, b2, w3, b3):
    # Embedding + fc1 run in full f32 (matching the fused table); fc2/fc3 use
    # the same intentional bf16 weight cast as the kernel, computed in f32.
    f32 = jnp.float32
    w2f = w2.astype(jnp.bfloat16).astype(f32)
    w3f = w3.astype(jnp.bfloat16).astype(f32)
    x = emb.astype(f32)[ids]                                  # (B, S, H)
    x = jnp.maximum(x @ w1.astype(f32).T + b1, 0.0)
    x = jnp.maximum(x @ w2f.T + b2, 0.0)
    x = x @ w3f.T + b3
    return x


if __name__ == "__main__":
    # Small, deterministic config.
    input_size = 32     # vocab
    hidden_size = 128
    output_size = 8
    batch, seq = 2, 8

    key = jax.random.PRNGKey(0)
    k_ids, k_emb, k1, k2, k3, kb1, kb2, kb3 = jax.random.split(key, 8)

    ids = jax.random.randint(k_ids, (batch, seq), 0, input_size, dtype=jnp.int32)

    emb = jax.random.normal(k_emb, (input_size, hidden_size), jnp.float32) * 0.1
    w1 = jax.random.normal(k1, (hidden_size, hidden_size), jnp.float32) * 0.05
    b1 = jax.random.normal(kb1, (hidden_size,), jnp.float32) * 0.01
    w2 = jax.random.normal(k2, (hidden_size, hidden_size), jnp.float32) * 0.05
    b2 = jax.random.normal(kb2, (hidden_size,), jnp.float32) * 0.01
    w3 = jax.random.normal(k3, (output_size, hidden_size), jnp.float32) * 0.05
    b3 = jax.random.normal(kb3, (output_size,), jnp.float32) * 0.01

    out = custom_model_forward(ids, emb, w1, b1, w2, b2, w3, b3)
    out = jax.block_until_ready(out)

    ref = reference_forward(ids, emb, w1, b1, w2, b2, w3, b3)
    assert out.shape == (batch, seq, output_size)
    assert jnp.allclose(out, ref, atol=2e-3, rtol=2e-2), (
        float(jnp.max(jnp.abs(out - ref))))

    print("KERNEL_OK")
</pallas_src>

<mosaic_0001>
module attributes {stable_mosaic.version = 11 : i64} {
  func.func @fused_mlp_kernel(%arg0: i32, %arg1: memref<16x1xi32, #tpu.memory_space<vmem>>, %arg2: memref<32x128xf32, #tpu.memory_space<vmem>>, %arg3: memref<128x256xbf16, #tpu.memory_space<vmem>>, %arg4: memref<1x256xf32, #tpu.memory_space<vmem>>, %arg5: memref<16x128xbf16, #tpu.memory_space<vmem>>) attributes {dimension_semantics = [#tpu.dimension_semantics<parallel>], iteration_bounds = array<i64: 1>, scalar_prefetch = 0 : i64, scratch_operands = 0 : i64, tpu.core_type = #tpu.core_type<tc>, window_params = [{transform_indices = @transform_0, window_bounds = array<i64: 16, 1>}, {pipeline_mode = #tpu.pipeline_mode<synchronous>, transform_indices = @transform_1, window_bounds = array<i64: 32, 128>}, {pipeline_mode = #tpu.pipeline_mode<synchronous>, transform_indices = @transform_2, window_bounds = array<i64: 128, 256>}, {pipeline_mode = #tpu.pipeline_mode<synchronous>, transform_indices = @transform_3, window_bounds = array<i64: 1, 256>}, {transform_indices = @transform_4, window_bounds = array<i64: 16, 128>}]} {
    %c0 = arith.constant 0 : index
    %c0_0 = arith.constant 0 : index
    %0 = vector.load %arg1[%c0, %c0_0] : memref<16x1xi32, #tpu.memory_space<vmem>>, vector<16x1xi32>
    %1 = tpu.iota {dimensions = array<i32: 1>} : vector<16x32xi32>
    %2 = vector.broadcast %0 : vector<16x1xi32> to vector<16x32xi32>
    %3 = arith.cmpi eq, %2, %1 : vector<16x32xi32>
    %4 = arith.extui %3 : vector<16x32xi1> to vector<16x32xi32>
    %5 = arith.sitofp %4 : vector<16x32xi32> to vector<16x32xf32>
    %c0_1 = arith.constant 0 : index
    %c0_2 = arith.constant 0 : index
    %6 = vector.load %arg2[%c0_1, %c0_2] : memref<32x128xf32, #tpu.memory_space<vmem>>, vector<32x128xf32>
    %cst = arith.constant dense<0.000000e+00> : vector<16x128xf32>
    %7 = tpu.matmul %5, %6, %cst {dimension_numbers = #tpu.dot_dimension_numbers<[1], [0], [0], [1], [0, 0, 1, 1], [], []>} : vector<16x32xf32>, vector<32x128xf32>, vector<16x128xf32> -> vector<16x128xf32>
    %8 = arith.truncf %7 : vector<16x128xf32> to vector<16x128xbf16>
    %c0_3 = arith.constant 0 : index
    %c0_4 = arith.constant 0 : index
    %9 = vector.load %arg3[%c0_3, %c0_4] : memref<128x256xbf16, #tpu.memory_space<vmem>>, vector<128x128xbf16>
    %c0_5 = arith.constant 0 : index
    %c128 = arith.constant 128 : index
    %10 = vector.load %arg3[%c0_5, %c128] : memref<128x256xbf16, #tpu.memory_space<vmem>>, vector<128x128xbf16>
    %c0_6 = arith.constant 0 : index
    %c0_7 = arith.constant 0 : index
    %11 = vector.load %arg4[%c0_6, %c0_7] : memref<1x256xf32, #tpu.memory_space<vmem>>, vector<1x128xf32>
    %c0_8 = arith.constant 0 : index
    %c128_9 = arith.constant 128 : index
    %12 = vector.load %arg4[%c0_8, %c128_9] : memref<1x256xf32, #tpu.memory_space<vmem>>, vector<1x128xf32>
    %cst_10 = arith.constant dense<0.000000e+00> : vector<16x128xf32>
    %13 = tpu.matmul %8, %9, %cst_10 {dimension_numbers = #tpu.dot_dimension_numbers<[1], [0], [0], [1], [0, 0, 1, 1], [], []>} : vector<16x128xbf16>, vector<128x128xbf16>, vector<16x128xf32> -> vector<16x128xf32>
    %14 = vector.broadcast %11 : vector<1x128xf32> to vector<16x128xf32>
    %15 = arith.addf %13, %14 : vector<16x128xf32>
    %cst_11 = arith.constant 0.000000e+00 : f32
    %16 = vector.broadcast %cst_11 : f32 to vector<16x128xf32>
    %17 = arith.maximumf %15, %16 : vector<16x128xf32>
    %18 = arith.truncf %17 : vector<16x128xf32> to vector<16x128xbf16>
    %cst_12 = arith.constant dense<0.000000e+00> : vector<16x128xf32>
    %19 = tpu.matmul %18, %10, %cst_12 {dimension_numbers = #tpu.dot_dimension_numbers<[1], [0], [0], [1], [0, 0, 1, 1], [], []>} : vector<16x128xbf16>, vector<128x128xbf16>, vector<16x128xf32> -> vector<16x128xf32>
    %20 = vector.broadcast %12 : vector<1x128xf32> to vector<16x128xf32>
    %21 = arith.addf %19, %20 : vector<16x128xf32>
    %22 = arith.truncf %21 : vector<16x128xf32> to vector<16x128xbf16>
    %c0_13 = arith.constant 0 : index
    %c0_14 = arith.constant 0 : index
    %23 = vector.load %arg5[%c0_13, %c0_14] : memref<16x128xbf16, #tpu.memory_space<vmem>>, vector<16x128xbf16>
    tpu.vector_store %arg5[%c0_13, %c0_14], %22 {strides = array<i32>} : memref<16x128xbf16, #tpu.memory_space<vmem>>, vector<16x128xbf16>,
    return
  }
  func.func @transform_0(%arg0: i32) -> (i32, i32) {
    %c0_i32 = arith.constant 0 : i32
    %c0_i32_0 = arith.constant 0 : i32
    return %arg0, %c0_i32 : i32, i32
  }
  func.func @transform_1(%arg0: i32) -> (i32, i32) {
    %c0_i32 = arith.constant 0 : i32
    %c0_i32_0 = arith.constant 0 : i32
    %c0_i32_1 = arith.constant 0 : i32
    return %c0_i32, %c0_i32_0 : i32, i32
  }
  func.func @transform_2(%arg0: i32) -> (i32, i32) {
    %c0_i32 = arith.constant 0 : i32
    %c0_i32_0 = arith.constant 0 : i32
    %c0_i32_1 = arith.constant 0 : i32
    return %c0_i32, %c0_i32_0 : i32, i32
  }
  func.func @transform_3(%arg0: i32) -> (i32, i32) {
    %c0_i32 = arith.constant 0 : i32
    %c0_i32_0 = arith.constant 0 : i32
    %c0_i32_1 = arith.constant 0 : i32
    return %c0_i32, %c0_i32_0 : i32, i32
  }
  func.func @transform_4(%arg0: i32) -> (i32, i32) {
    %c0_i32 = arith.constant 0 : i32
    %c0_i32_0 = arith.constant 0 : i32
    return %arg0, %c0_i32 : i32, i32
  }
}

</mosaic_0001>

<llo_original>
// kernel: tpu_custom_call.1
$region0: #{tpu_custom_call.1}
  #allocation0 [shape = 'u32[]', space=smem, size = 0x4, offset = 0x4, fixed_abs, tag = 'smem constant byte address 0x4 - core index']
  #allocation1 [shape = 'u32[72,128]{1,0:T(1,128)}', space=vmem, size = 0x9000, scoped, tag = 'internal scratch']
  %s0 = inlined_call_operand.vmem [shape: s32[16,1], index: 0, kind: input, shape index: {}]
  %s1 = inlined_call_operand.hbm [shape: f32[32,128], index: 1, kind: input, shape index: {}]
  %s2 = inlined_call_operand.hbm [shape: bf16[128,256], index: 2, kind: input, shape index: {}]
  %s3 = inlined_call_operand.vmem [shape: f32[1,256], index: 3, kind: input, shape index: {}]
  %s4 = inlined_call_operand.hbm [shape: bf16[16,128], index: 4, kind: output, shape index: {}]
  %s5 = sld [smem:[#allocation0]]
  $region34: #{tpu_custom_call.1} parent=0
    _
  %s7 = ssub.s32 1, %s5
  %s8 = scalar_select 0, %s7, %s5
  $region1: #{tpu_custom_call.1} parent=0
    #allocation2 [shape = 'u8[16384]{0}', space=vmem, size = 0x4000, scoped, tag = 'input window, operand 1, single buffered']
    #allocation3 [shape = 's32[1]{0}', space=sflag, size = 0x4, scoped, tag = 'scoped memory for tpu_custom_call.1']
    #allocation4 [shape = 's32[1]{0}', space=sflag, size = 0x4, scoped, tag = 'scoped memory for tpu_custom_call.1']
    #allocation5 [shape = 'u8[65536]{0}', space=vmem, size = 0x10000, scoped, tag = 'input window, operand 2, single buffered']
    #allocation6 [shape = 's32[1]{0}', space=sflag, size = 0x4, scoped, tag = 'scoped memory for tpu_custom_call.1']
    #allocation7 [shape = 'u8[4096]{0}', space=vmem, size = 0x1000, scoped, tag = 'output window, operand 0, single buffered']
    %9 = vsyncpa [#allocation3], 0
    %10 = vsyncpa [#allocation6], 0
    %11 = vsyncpa [#allocation4], 0
    // Predicated region
    $region2: #{tpu_custom_call.1} parent=1 // pred_check
      _
    $region3: #{tpu_custom_call.1} parent=1 // pred_check_branch
      %13 = sbr.rel (0) target = $region5
    $region4: #{tpu_custom_call.1} parent=1 // pred_region
      _
    $region5: #{tpu_custom_call.1} parent=1 // pred_fallthru
      _
    // Predicated region
    $region6: #{tpu_custom_call.1} parent=1 // pred_check
      _
    $region7: #{tpu_custom_call.1} parent=1 // pred_check_branch
      %15 = sbr.rel (0) target = $region9
    $region8: #{tpu_custom_call.1} parent=1 // pred_region
      %17 = vsyncadd [#allocation3], 0
      %s18 = sshll.u32 %s1, 4
      %s19 = int_to_ptr.hbm [resolvable:$true] %s18
      %s20 = sshll.u32 [#allocation2], 4
      %s21 = int_to_ptr.vmem [resolvable:$true] %s20
      %26 = dma.hbm_to_vmem [thread:$0]  %s19, 512, %s21, [#allocation3], 128, 128, 8
    $region9: #{tpu_custom_call.1} parent=1 // pred_fallthru
      _
    // Predicated region
    $region10: #{tpu_custom_call.1} parent=1 // pred_check
      _
    $region11: #{tpu_custom_call.1} parent=1 // pred_check_branch
      %28 = sbr.rel (0) target = $region13
    $region12: #{tpu_custom_call.1} parent=1 // pred_region
      %30 = vsyncadd [#allocation6], 0
      %s31 = sshll.u32 %s2, 4
      %s32 = int_to_ptr.hbm [resolvable:$true] %s31
      %s33 = sshll.u32 [#allocation5], 4
      %s34 = int_to_ptr.vmem [resolvable:$true] %s33
      %39 = dma.hbm_to_vmem [thread:$0]  %s32, 2048, %s34, [#allocation6], 128, 128, 8
    $region13: #{tpu_custom_call.1} parent=1 // pred_fallthru
      _
    // Predicated region
    $region14: #{tpu_custom_call.1} parent=1 // pred_check
      _
    $region15: #{tpu_custom_call.1} parent=1 // pred_check_branch
      %41 = sbr.rel (0) target = $region17
    $region16: #{tpu_custom_call.1} parent=1 // pred_region
      _
    $region17: #{tpu_custom_call.1} parent=1 // pred_fallthru
      _
    // Predicated region
    $region18: #{tpu_custom_call.1} parent=1 // pred_check
      _
    $region19: #{tpu_custom_call.1} parent=1 // pred_check_branch
      %43 = sbr.rel (0) target = $region21
    $region20: #{tpu_custom_call.1} parent=1 // pred_region
      %45 = dma.done [#allocation3], 512
    $region21: #{tpu_custom_call.1} parent=1 // pred_fallthru
      _
    // Predicated region
    $region22: #{tpu_custom_call.1} parent=1 // pred_check
      _
    $region23: #{tpu_custom_call.1} parent=1 // pred_check_branch
      %47 = sbr.rel (0) target = $region25
    $region24: #{tpu_custom_call.1} parent=1 // pred_region
      %49 = dma.done [#allocation6], 2048
    $region25: #{tpu_custom_call.1} parent=1 // pred_fallthru
      _
    %v50 = vld [vmem:[%s0] sm:$0xff]
    %v51 = vld [vmem:[%s0 + $0x8] sm:$0xff]
    %v52 = vlaneseq
    %v53 = vand.u32 %v52, 127
    %54 = vset.pattern.permute.xlu0 0
    %55 = vperm.xlu0 %54, %v50
    %v56 = vpop.permute.xlu0 %55
    %57 = vset.pattern.permute.xlu0 0
    %58 = vperm.xlu0 %57, %v51
    %v59 = vpop.permute.xlu0 %58
    %vm60 = vcmp.eq.s32.totalorder %v56, %v53
    %vm61 = vcmp.eq.s32.totalorder %v59, %v53
    %v62 = vsel %vm60, 1, 0
    %v63 = vsel %vm61, 1, 0
    %v64 = vcvt.s32.f32 %v62
    %v65 = vcvt.s32.f32 %v63
    %v66 = vld [vmem:[#allocation2] sm:$0xff]
    %v67 = vld [vmem:[#allocation2 + $0x8] sm:$0xff]
    %v68 = vld [vmem:[#allocation2 + $0x10] sm:$0xff]
    %v69 = vld [vmem:[#allocation2 + $0x18] sm:$0xff]
    %vm70 = vcmask 261120
    %v72 = vsel %vm70, %v64, 0
    %v75 = vsel %vm70, %v65, 0
    %77 = vmatpush.msra.mxu0 0.0
    %78 = vmatpush.msra.mxu0 0.0
    %79 = vmatpush.msra.mxu0 0.0
    %80 = vmatpush.msra.mxu0 0.0
    %81 = vmatpush.msra.mxu0 0.0
    %82 = vmatpush.msra.mxu0 0.0
    %83 = vmatpush.msra.mxu0 0.0
    %84 = vmatpush.msra.mxu0 0.0
    %85 = vmatpush.msra.mxu0 0.0
    %86 = vmatpush.msra.mxu0 0.0
    %87 = vmatpush.msra.mxu0 0.0
    %88 = vmatpush.msra.mxu0 0.0
    %89 = vmatpush.msra.mxu0 %v69
    %90 = vmatpush.msra.mxu0 %v68
    %91 = vmatpush.msra.mxu0 %v67
    %92 = vmatpush.msra.mxu0 %v66
    %93 = vmatmul.f32.gmra.mxu0 %v72
    %v94 = vpop.f32.mrf.mxu0
    %v95 = vadd.f32 0.0, %v94
    %96 = vmatmul.f32.gmra.mxu0 %v75
    %v97 = vpop.f32.mrf.mxu0
    %v98 = vadd.f32 0.0, %v97
    %99 = vdwg.mxu0
    %v100 = vpack.c.bf16 %v98, %v95
    %v101 = vld [vmem:[#allocation5] sm:$0xf]
    %v102 = vld [vmem:[#allocation5 + $0x8] sm:$0xf]
    %v103 = vld [vmem:[#allocation5 + $0x10] sm:$0xf]
    %v104 = vld [vmem:[#allocation5 + $0x18] sm:$0xf]
    %v105 = vld [vmem:[#allocation5 + $0x20] sm:$0xf]
    %v106 = vld [vmem:[#allocation5 + $0x28] sm:$0xf]
    %v107 = vld [vmem:[#allocation5 + $0x30] sm:$0xf]
    %v108 = vld [vmem:[#allocation5 + $0x38] sm:$0xf]
    %v109 = vld [vmem:[#allocation5 + $0x40] sm:$0xf]
    %v110 = vld [vmem:[#allocation5 + $0x48] sm:$0xf]
    %v111 = vld [vmem:[#allocation5 + $0x50] sm:$0xf]
    %v112 = vld [vmem:[#allocation5 + $0x58] sm:$0xf]
    %v113 = vld [vmem:[#allocation5 + $0x60] sm:$0xf]
    %v114 = vld [vmem:[#allocation5 + $0x68] sm:$0xf]
    %v115 = vld [vmem:[#allocation5 + $0x70] sm:$0xf]
    %v116 = vld [vmem:[#allocation5 + $0x78] sm:$0xf]
    %v117 = vld [vmem:[#allocation5 + $0x4] sm:$0xf]
    %v118 = vld [vmem:[#allocation5 + $0xc] sm:$0xf]
    %v119 = vld [vmem:[#allocation5 + $0x14] sm:$0xf]
    %v120 = vld [vmem:[#allocation5 + $0x1c] sm:$0xf]
    %v121 = vld [vmem:[#allocation5 + $0x24] sm:$0xf]
    %v122 = vld [vmem:[#allocation5 + $0x2c] sm:$0xf]
    %v123 = vld [vmem:[#allocation5 + $0x34] sm:$0xf]
    %v124 = vld [vmem:[#allocation5 + $0x3c] sm:$0xf]
    %v125 = vld [vmem:[#allocation5 + $0x44] sm:$0xf]
    %v126 = vld [vmem:[#allocation5 + $0x4c] sm:$0xf]
    %v127 = vld [vmem:[#allocation5 + $0x54] sm:$0xf]
    %v128 = vld [vmem:[#allocation5 + $0x5c] sm:$0xf]
    %v129 = vld [vmem:[#allocation5 + $0x64] sm:$0xf]
    %v130 = vld [vmem:[#allocation5 + $0x6c] sm:$0xf]
    %v131 = vld [vmem:[#allocation5 + $0x74] sm:$0xf]
    %v132 = vld [vmem:[#allocation5 + $0x7c] sm:$0xf]
    %v133 = vld [vmem:[%s3] sm:$0x1]
    %v134 = vld [vmem:[%s3 + $0x1] sm:$0x1]
    %v136 = vperm.slane %v133, 0
    %v154 = vunpack.c.l.b16 %v101
    %v155 = vunpack.c.l.b16 %v102
    %v156 = vunpack.c.l.b16 %v103
    %v157 = vunpack.c.l.b16 %v104
    %v158 = vunpack.c.l.b16 %v105
    %v159 = vunpack.c.l.b16 %v106
    %v160 = vunpack.c.l.b16 %v107
    %v161 = vunpack.c.l.b16 %v108
    %v162 = vunpack.c.l.b16 %v109
    %v163 = vunpack.c.l.b16 %v110
    %v164 = vunpack.c.l.b16 %v111
    %v165 = vunpack.c.l.b16 %v112
    %v166 = vunpack.c.l.b16 %v113
    %v167 = vunpack.c.l.b16 %v114
    %v168 = vunpack.c.l.b16 %v115
    %v169 = vunpack.c.l.b16 %v116
    %v170 = vpack.c.b16 %v155, %v154
    %v171 = vpack.c.b16 %v157, %v156
    %v172 = vpack.c.b16 %v159, %v158
    %v173 = vpack.c.b16 %v161, %v160
    %v174 = vpack.c.b16 %v163, %v162
    %v175 = vpack.c.b16 %v165, %v164
    %v176 = vpack.c.b16 %v167, %v166
    %v177 = vpack.c.b16 %v169, %v168
    %186 = vmatpush.bf16.msra.mxu0 %v177
    %187 = vmatpush.bf16.msra.mxu0 %v176
    %188 = vmatpush.bf16.msra.mxu0 %v175
    %189 = vmatpush.bf16.msra.mxu0 %v174
    %190 = vmatpush.bf16.msra.mxu0 %v173
    %191 = vmatpush.bf16.msra.mxu0 %v172
    %192 = vmatpush.bf16.msra.mxu0 %v171
    %193 = vmatpush.bf16.msra.mxu0 %v170
    %194 = vmatmul.bf16.gmra.mxu0 %v100
    %v195 = vpop.f32.mrf.mxu0
    %v196 = vadd.f32 %v136, %v195
    %v197 = vpop.f32.mrf.mxu0
    %v198 = vadd.f32 %v136, %v197
    %199 = vdwg.mxu0
    %v200 = vmax.f32 %v196, 0.0
    %v201 = vmax.f32 %v198, 0.0
    %v202 = vpack.c.bf16 %v201, %v200
    %v204 = vperm.slane %v134, 0
    %v222 = vunpack.c.l.b16 %v117
    %v223 = vunpack.c.l.b16 %v118
    %v224 = vunpack.c.l.b16 %v119
    %v225 = vunpack.c.l.b16 %v120
    %v226 = vunpack.c.l.b16 %v121
    %v227 = vunpack.c.l.b16 %v122
    %v228 = vunpack.c.l.b16 %v123
    %v229 = vunpack.c.l.b16 %v124
    %v230 = vunpack.c.l.b16 %v125
    %v231 = vunpack.c.l.b16 %v126
    %v232 = vunpack.c.l.b16 %v127
    %v233 = vunpack.c.l.b16 %v128
    %v234 = vunpack.c.l.b16 %v129
    %v235 = vunpack.c.l.b16 %v130
    %v236 = vunpack.c.l.b16 %v131
    %v237 = vunpack.c.l.b16 %v132
    %v238 = vpack.c.b16 %v223, %v222
    %v239 = vpack.c.b16 %v225, %v224
    %v240 = vpack.c.b16 %v227, %v226
    %v241 = vpack.c.b16 %v229, %v228
    %v242 = vpack.c.b16 %v231, %v230
    %v243 = vpack.c.b16 %v233, %v232
    %v244 = vpack.c.b16 %v235, %v234
    %v245 = vpack.c.b16 %v237, %v236
    %254 = vmatpush.bf16.msra.mxu0 %v245
    %255 = vmatpush.bf16.msra.mxu0 %v244
    %256 = vmatpush.bf16.msra.mxu0 %v243
    %257 = vmatpush.bf16.msra.mxu0 %v242
    %258 = vmatpush.bf16.msra.mxu0 %v241
    %259 = vmatpush.bf16.msra.mxu0 %v240
    %260 = vmatpush.bf16.msra.mxu0 %v239
    %261 = vmatpush.bf16.msra.mxu0 %v238
    %262 = vmatmul.bf16.gmra.mxu0 %v202
    %v263 = vpop.f32.mrf.mxu0
    %v264 = vadd.f32 %v204, %v263
    %v265 = vpop.f32.mrf.mxu0
    %v266 = vadd.f32 %v204, %v265
    %267 = vdwg.mxu0
    %v268 = vpack.c.bf16 %v264, %v264
    %v269 = vpack.c.bf16 %v266, %v266
    %270 = vst [vmem:[#allocation7] sm:$0xf] %v268
    %271 = vst [vmem:[#allocation7 + $0x4] sm:$0xf] %v269
    // Predicated region
    $region26: #{tpu_custom_call.1} parent=1 // pred_check
      _
    $region27: #{tpu_custom_call.1} parent=1 // pred_check_branch
      %273 = sbr.rel (0) target = $region29
    $region28: #{tpu_custom_call.1} parent=1 // pred_region
      %275 = vsyncadd [#allocation4], 0
      %s276 = sshll.u32 [#allocation7], 4
      %s277 = int_to_ptr.vmem [resolvable:$true] %s276
      %s278 = sshll.u32 %s4, 4
      %s279 = int_to_ptr.hbm [resolvable:$true] %s278
      %284 = dma.vmem_to_hbm [thread:$0]  %s277, 128, %s279, [#allocation4], 64, 64, 4
    $region29: #{tpu_custom_call.1} parent=1 // pred_fallthru
      _
    // Predicated region
    $region30: #{tpu_custom_call.1} parent=1 // pred_check
      _
    $region31: #{tpu_custom_call.1} parent=1 // pred_check_branch
      %286 = sbr.rel (0) target = $region33
    $region32: #{tpu_custom_call.1} parent=1 // pred_region
      %288 = dma.done [#allocation4], 128
    $region33: #{tpu_custom_call.1} parent=1 // pred_fallthru
      _
    %289 = vsyncpa [#allocation3], 1
    %290 = vsyncpa [#allocation6], 1
    %291 = vsyncpa [#allocation4], 1

</llo_original>
